<compile_context>
chip_gen: v7x
topology: tpu7x:2x2x1
jax: 0.10.0
libtpu: 0.0.40
codegen_flags: <defaults>
</compile_context>

<pallas_src>
import functools

import jax
import jax.numpy as jnp
from jax.experimental import pallas as pl
from jax.experimental.pallas import tpu as pltpu


# ----------------------------------------------------------------------------- helpers

def _round_up(x, m):
    return ((x + m - 1) // m) * m


# ----------------------------------------------------------------------------- kernel

def _critic_mlp_kernel(x_ref, w1_ref, wr_ref, b1_ref, br_ref, out_ref):
    """Fused 4-layer MLP in transposed (batch-on-lanes) layout.

    x_ref  : [D_IN, TB]        padded input activations (features on sublanes, batch on lanes)
    w1_ref : [D_HID, D_IN]     layer-1 weight, PyTorch layout [out, in], zero-padded on `in`
    wr_ref : [3, D_HID, D_HID] layers 2..4 weights, zero-padded to a single square slab
    b1_ref : [D_HID, 1]        layer-1 bias (column vector -> lane broadcast)
    br_ref : [3, D_HID, 1]     layers 2..4 biases, zero-padded
    out_ref: [OUT_PAD, TB]     first `action_dim` rows are the critic output
    """
    h = jnp.dot(w1_ref[...], x_ref[...], preferred_element_type=jnp.float32) + b1_ref[...]
    h = jnp.maximum(h, 0.0)                                   # ReLU
    for i in range(wr_ref.shape[0]):                          # unrolled: 3 more MXU matmuls
        h = jnp.dot(wr_ref[i], h, preferred_element_type=jnp.float32) + br_ref[i]
        h = jnp.maximum(h, 0.0)                               # ReLU (incl. final layer, per spec)
    out_ref[...] = h[: out_ref.shape[0], :].astype(out_ref.dtype)


# ----------------------------------------------------------------------------- params packing

def pack_critic_params(params):
    """Pack weights/biases into kernel-friendly, zero-padded arrays (arrays only — no
    Python ints in the returned pytree, so it is safe to pass through jit).

    Zero padding is semantics-preserving: padded output rows get bias 0 -> relu(0) = 0,
    and the next layer's padded input columns are 0, so padded features never contribute.
    """
    ws = [params[f"w{i}"] for i in range(1, 5)]   # PyTorch layout [out, in]
    bs = [params[f"b{i}"] for i in range(1, 5)]
    state_dim = ws[0].shape[1]
    d_in = _round_up(max(state_dim, 8), 8)        # streamed-feature pad (small!)
    d_hid = 64                                    # widest hidden layer

    w1 = jnp.pad(ws[0], ((0, d_hid - ws[0].shape[0]), (0, d_in - state_dim)))
    b1 = jnp.pad(bs[0], (0, d_hid - bs[0].shape[0]))[:, None]
    w_rest = jnp.stack(
        [jnp.pad(w, ((0, d_hid - w.shape[0]), (0, d_hid - w.shape[1]))) for w in ws[1:]])
    b_rest = jnp.stack(
        [jnp.pad(b, (0, d_hid - b.shape[0]))[:, None] for b in bs[1:]])

    return {
        "w1": w1.astype(jnp.float32),
        "w_rest": w_rest.astype(jnp.float32),
        "b1": b1.astype(jnp.float32),
        "b_rest": b_rest.astype(jnp.float32),
    }


# ----------------------------------------------------------------------------- wrapper

@functools.partial(jax.jit, static_argnames=("action_dim", "tb_max"))
def critic_forward(state, packed, *, action_dim, tb_max=4096):
    """state: [batch, state_dim] f32 -> value: [batch, action_dim] f32."""
    batch, state_dim = state.shape                 # static under jit
    w1, w_rest = packed["w1"], packed["w_rest"]
    b1, b_rest = packed["b1"], packed["b_rest"]
    d_hid, d_in = w1.shape                         # static
    out_pad = _round_up(max(action_dim, 8), 8)     # sublane-aligned output rows

    # Lane-dense batch tiling: pad batch to a multiple of 128 and take the largest
    # tile that fits tb_max (per-step overhead ~0.35 us, so big tiles win).  If the
    # whole batch fits in one tile but is >=512 columns, split it into 2 tiles so a
    # v7x megacore keeps both TensorCores busy (no measured cost on v5e/v6e).
    tb_max = max(128, (tb_max // 128) * 128)
    bp = _round_up(max(batch, 128), 128)
    if bp <= tb_max:
        if bp >= 512 and bp % 256 == 0:
            tb = bp // 2
        else:
            tb = bp
    else:
        tb = tb_max
        bp = _round_up(bp, tb)
    grid = (bp // tb,)

    # Wrapper-side layout plumbing: transpose + (small) pad so the kernel sees
    # [features, batch] with batch on the lane axis.  Feature pad is only to
    # round_up(state_dim, 8), keeping this copy ~8x smaller than padding to 64.
    x_t = jnp.pad(state.T, ((0, d_in - state_dim), (0, bp - batch)))

    out_t = pl.pallas_call(
        _critic_mlp_kernel,
        out_shape=jax.ShapeDtypeStruct((out_pad, bp), jnp.float32),
        grid_spec=pltpu.PrefetchScalarGridSpec(
            num_scalar_prefetch=0,
            grid=grid,
            in_specs=[
                pl.BlockSpec((d_in, tb), lambda i: (0, i)),           # activations: streamed
                pl.BlockSpec((d_hid, d_in), lambda i: (0, 0)),        # W1: VMEM-resident
                pl.BlockSpec((3, d_hid, d_hid), lambda i: (0, 0, 0)), # W2..W4: VMEM-resident
                pl.BlockSpec((d_hid, 1), lambda i: (0, 0)),           # b1
                pl.BlockSpec((3, d_hid, 1), lambda i: (0, 0, 0)),     # b2..b4
            ],
            out_specs=pl.BlockSpec((out_pad, tb), lambda i: (0, i)),
        ),
        compiler_params=pltpu.CompilerParams(
            dimension_semantics=("parallel",),     # batch tiles shard across TCs (v7x)
        ),
    )(x_t, w1, w_rest, b1, b_rest)

    return out_t[:action_dim, :batch].T

# NOTE: for the acting path (batch ~ 1-32) the padded-to-128 Pallas call is pure fixed
# overhead; a dispatcher could route tiny batches to `_reference_forward` (plain XLA)
# and reserve the kernel for large rollout/training batches.


# ----------------------------------------------------------------------------- params / reference

def init_critic_params(key, state_dim, action_dim):
    """torch.nn.Linear default init: U(-1/sqrt(fan_in), 1/sqrt(fan_in)).
    Weights stored PyTorch-style as [out_features, in_features]."""
    dims = [(state_dim, 64), (64, 32), (32, 16), (16, action_dim)]
    params = {}
    for i, (fan_in, fan_out) in enumerate(dims, start=1):
        key, kw, kb = jax.random.split(key, 3)
        bound = 1.0 / jnp.sqrt(jnp.float32(fan_in))
        params[f"w{i}"] = jax.random.uniform(
            kw, (fan_out, fan_in), jnp.float32, minval=-bound, maxval=bound)
        params[f"b{i}"] = jax.random.uniform(
            kb, (fan_out,), jnp.float32, minval=-bound, maxval=bound)
    return params


def _reference_forward(state, params):
    """Pure-JAX reference for correctness checking (matches PyTorch forward)."""
    x = state
    for i in range(1, 5):
        x = jnp.maximum(x @ params[f"w{i}"].T + params[f"b{i}"], 0.0)
    return x


# TODO(synk): SharedAdam optimizer / Learn() / save_weights / load_weights are host-side
# training utilities, not part of the forward pass — not translated.

# ----------------------------------------------------------------------------- main

if __name__ == "__main__":
    STATE_DIM = 8
    ACTION_DIM = 4
    BATCH = 8

    key = jax.random.PRNGKey(0)
    key, k_state, k_big = jax.random.split(key, 3)

    params = init_critic_params(key, STATE_DIM, ACTION_DIM)
    packed = pack_critic_params(params)

    # Small demo batch (single 128-column tile).
    state = jax.random.normal(k_state, (BATCH, STATE_DIM), jnp.float32)
    v = jax.block_until_ready(critic_forward(state, packed, action_dim=ACTION_DIM))
    v_ref = _reference_forward(state, params)
    assert v.shape == (BATCH, ACTION_DIM)
    assert jnp.allclose(v, v_ref, atol=1e-4, rtol=1e-4), "mismatch vs JAX reference (small batch)"

    # Larger batch to exercise the multi-step parallel grid (2 tiles of 512 columns).
    big_state = jax.random.normal(k_big, (1000, STATE_DIM), jnp.float32)
    v_big = jax.block_until_ready(critic_forward(big_state, packed, action_dim=ACTION_DIM))
    v_big_ref = _reference_forward(big_state, params)
    assert v_big.shape == (1000, ACTION_DIM)
    assert jnp.allclose(v_big, v_big_ref, atol=1e-4, rtol=1e-4), "mismatch vs JAX reference (big batch)"

    print("KERNEL_OK")
</pallas_src>

<mosaic_0001>
module attributes {stable_mosaic.version = 11 : i64} {
  func.func @_critic_mlp_kernel(%arg0: i32, %arg1: memref<8x128xf32, #tpu.memory_space<vmem>>, %arg2: memref<64x8xf32, #tpu.memory_space<vmem>>, %arg3: memref<3x64x64xf32, #tpu.memory_space<vmem>>, %arg4: memref<64x1xf32, #tpu.memory_space<vmem>>, %arg5: memref<3x64x1xf32, #tpu.memory_space<vmem>>, %arg6: memref<8x128xf32, #tpu.memory_space<vmem>>) attributes {dimension_semantics = [#tpu.dimension_semantics<parallel>], iteration_bounds = array<i64: 1>, scalar_prefetch = 0 : i64, scratch_operands = 0 : i64, tpu.core_type = #tpu.core_type<tc>, window_params = [{transform_indices = @transform_0, window_bounds = array<i64: 8, 128>}, {pipeline_mode = #tpu.pipeline_mode<synchronous>, transform_indices = @transform_1, window_bounds = array<i64: 64, 8>}, {pipeline_mode = #tpu.pipeline_mode<synchronous>, transform_indices = @transform_2, window_bounds = array<i64: 3, 64, 64>}, {pipeline_mode = #tpu.pipeline_mode<synchronous>, transform_indices = @transform_3, window_bounds = array<i64: 64, 1>}, {pipeline_mode = #tpu.pipeline_mode<synchronous>, transform_indices = @transform_4, window_bounds = array<i64: 3, 64, 1>}, {transform_indices = @transform_5, window_bounds = array<i64: 8, 128>}]} {
    %c0 = arith.constant 0 : index
    %c0_0 = arith.constant 0 : index
    %0 = vector.load %arg2[%c0, %c0_0] : memref<64x8xf32, #tpu.memory_space<vmem>>, vector<64x8xf32>
    %c0_1 = arith.constant 0 : index
    %c0_2 = arith.constant 0 : index
    %1 = vector.load %arg1[%c0_1, %c0_2] : memref<8x128xf32, #tpu.memory_space<vmem>>, vector<8x128xf32>
    %cst = arith.constant dense<0.000000e+00> : vector<64x128xf32>
    %2 = tpu.matmul %0, %1, %cst {dimension_numbers = #tpu.dot_dimension_numbers<[1], [0], [0], [1], [0, 0, 1, 1], [], []>} : vector<64x8xf32>, vector<8x128xf32>, vector<64x128xf32> -> vector<64x128xf32>
    %c0_3 = arith.constant 0 : index
    %c0_4 = arith.constant 0 : index
    %3 = vector.load %arg4[%c0_3, %c0_4] : memref<64x1xf32, #tpu.memory_space<vmem>>, vector<64x1xf32>
    %4 = vector.broadcast %3 : vector<64x1xf32> to vector<64x128xf32>
    %5 = arith.addf %2, %4 : vector<64x128xf32>
    %cst_5 = arith.constant 0.000000e+00 : f32
    %6 = vector.broadcast %cst_5 : f32 to vector<64x128xf32>
    %7 = arith.maximumf %5, %6 : vector<64x128xf32>
    %c0_6 = arith.constant 0 : index
    %c0_7 = arith.constant 0 : index
    %c0_8 = arith.constant 0 : index
    %8 = vector.load %arg3[%c0_6, %c0_7, %c0_8] : memref<3x64x64xf32, #tpu.memory_space<vmem>>, vector<1x64x64xf32>
    %9 = vector.shape_cast %8 : vector<1x64x64xf32> to vector<64x64xf32>
    %cst_9 = arith.constant dense<0.000000e+00> : vector<64x128xf32>
    %10 = tpu.matmul %9, %7, %cst_9 {dimension_numbers = #tpu.dot_dimension_numbers<[1], [0], [0], [1], [0, 0, 1, 1], [], []>} : vector<64x64xf32>, vector<64x128xf32>, vector<64x128xf32> -> vector<64x128xf32>
    %c0_10 = arith.constant 0 : index
    %c0_11 = arith.constant 0 : index
    %c0_12 = arith.constant 0 : index
    %11 = vector.load %arg5[%c0_10, %c0_11, %c0_12] : memref<3x64x1xf32, #tpu.memory_space<vmem>>, vector<1x64x1xf32>
    %12 = vector.shape_cast %11 : vector<1x64x1xf32> to vector<64x1xf32>
    %13 = vector.broadcast %12 : vector<64x1xf32> to vector<64x128xf32>
    %14 = arith.addf %10, %13 : vector<64x128xf32>
    %cst_13 = arith.constant 0.000000e+00 : f32
    %15 = vector.broadcast %cst_13 : f32 to vector<64x128xf32>
    %16 = arith.maximumf %14, %15 : vector<64x128xf32>
    %c1 = arith.constant 1 : index
    %c0_14 = arith.constant 0 : index
    %c0_15 = arith.constant 0 : index
    %17 = vector.load %arg3[%c1, %c0_14, %c0_15] : memref<3x64x64xf32, #tpu.memory_space<vmem>>, vector<1x64x64xf32>
    %18 = vector.shape_cast %17 : vector<1x64x64xf32> to vector<64x64xf32>
    %cst_16 = arith.constant dense<0.000000e+00> : vector<64x128xf32>
    %19 = tpu.matmul %18, %16, %cst_16 {dimension_numbers = #tpu.dot_dimension_numbers<[1], [0], [0], [1], [0, 0, 1, 1], [], []>} : vector<64x64xf32>, vector<64x128xf32>, vector<64x128xf32> -> vector<64x128xf32>
    %c1_17 = arith.constant 1 : index
    %c0_18 = arith.constant 0 : index
    %c0_19 = arith.constant 0 : index
    %20 = vector.load %arg5[%c1_17, %c0_18, %c0_19] : memref<3x64x1xf32, #tpu.memory_space<vmem>>, vector<1x64x1xf32>
    %21 = vector.shape_cast %20 : vector<1x64x1xf32> to vector<64x1xf32>
    %22 = vector.broadcast %21 : vector<64x1xf32> to vector<64x128xf32>
    %23 = arith.addf %19, %22 : vector<64x128xf32>
    %cst_20 = arith.constant 0.000000e+00 : f32
    %24 = vector.broadcast %cst_20 : f32 to vector<64x128xf32>
    %25 = arith.maximumf %23, %24 : vector<64x128xf32>
    %c2 = arith.constant 2 : index
    %c0_21 = arith.constant 0 : index
    %c0_22 = arith.constant 0 : index
    %26 = vector.load %arg3[%c2, %c0_21, %c0_22] : memref<3x64x64xf32, #tpu.memory_space<vmem>>, vector<1x64x64xf32>
    %27 = vector.shape_cast %26 : vector<1x64x64xf32> to vector<64x64xf32>
    %cst_23 = arith.constant dense<0.000000e+00> : vector<64x128xf32>
    %28 = tpu.matmul %27, %25, %cst_23 {dimension_numbers = #tpu.dot_dimension_numbers<[1], [0], [0], [1], [0, 0, 1, 1], [], []>} : vector<64x64xf32>, vector<64x128xf32>, vector<64x128xf32> -> vector<64x128xf32>
    %c2_24 = arith.constant 2 : index
    %c0_25 = arith.constant 0 : index
    %c0_26 = arith.constant 0 : index
    %29 = vector.load %arg5[%c2_24, %c0_25, %c0_26] : memref<3x64x1xf32, #tpu.memory_space<vmem>>, vector<1x64x1xf32>
    %30 = vector.shape_cast %29 : vector<1x64x1xf32> to vector<64x1xf32>
    %31 = vector.broadcast %30 : vector<64x1xf32> to vector<64x128xf32>
    %32 = arith.addf %28, %31 : vector<64x128xf32>
    %cst_27 = arith.constant 0.000000e+00 : f32
    %33 = vector.broadcast %cst_27 : f32 to vector<64x128xf32>
    %34 = arith.maximumf %32, %33 : vector<64x128xf32>
    %35 = vector.extract_strided_slice %34 {offsets = [0, 0], sizes = [8, 128], strides = [1, 1]} : vector<64x128xf32> to vector<8x128xf32>
    %c0_28 = arith.constant 0 : index
    %c0_29 = arith.constant 0 : index
    %36 = vector.load %arg6[%c0_28, %c0_29] : memref<8x128xf32, #tpu.memory_space<vmem>>, vector<8x128xf32>
    tpu.vector_store %arg6[%c0_28, %c0_29], %35 {strides = array<i32>} : memref<8x128xf32, #tpu.memory_space<vmem>>, vector<8x128xf32>,
    return
  }
  func.func @transform_0(%arg0: i32) -> (i32, i32) {
    %c0_i32 = arith.constant 0 : i32
    %c0_i32_0 = arith.constant 0 : i32
    return %c0_i32, %arg0 : i32, i32
  }
  func.func @transform_1(%arg0: i32) -> (i32, i32) {
    %c0_i32 = arith.constant 0 : i32
    %c0_i32_0 = arith.constant 0 : i32
    %c0_i32_1 = arith.constant 0 : i32
    return %c0_i32, %c0_i32_0 : i32, i32
  }
  func.func @transform_2(%arg0: i32) -> (i32, i32, i32) {
    %c0_i32 = arith.constant 0 : i32
    %c0_i32_0 = arith.constant 0 : i32
    %c0_i32_1 = arith.constant 0 : i32
    %c0_i32_2 = arith.constant 0 : i32
    return %c0_i32, %c0_i32_0, %c0_i32_1 : i32, i32, i32
  }
  func.func @transform_3(%arg0: i32) -> (i32, i32) {
    %c0_i32 = arith.constant 0 : i32
    %c0_i32_0 = arith.constant 0 : i32
    %c0_i32_1 = arith.constant 0 : i32
    return %c0_i32, %c0_i32_0 : i32, i32
  }
  func.func @transform_4(%arg0: i32) -> (i32, i32, i32) {
    %c0_i32 = arith.constant 0 : i32
    %c0_i32_0 = arith.constant 0 : i32
    %c0_i32_1 = arith.constant 0 : i32
    %c0_i32_2 = arith.constant 0 : i32
    return %c0_i32, %c0_i32_0, %c0_i32_1 : i32, i32, i32
  }
  func.func @transform_5(%arg0: i32) -> (i32, i32) {
    %c0_i32 = arith.constant 0 : i32
    %c0_i32_0 = arith.constant 0 : i32
    return %c0_i32, %arg0 : i32, i32
  }
}

</mosaic_0001>

<llo_original>
// kernel: critic_forward.1
$region0: #{critic_forward.1}
  #allocation0 [shape = 'u32[]', space=smem, size = 0x4, offset = 0x4, fixed_abs, tag = 'smem constant byte address 0x4 - core index']
  #allocation1 [shape = 'u32[144,128]{1,0:T(1,128)}', space=vmem, size = 0x12000, scoped, tag = 'internal scratch']
  %s0 = inlined_call_operand.vmem [shape: f32[8,128], index: 0, kind: input, shape index: {}]
  %s1 = inlined_call_operand.vmem [shape: f32[64,8], index: 1, kind: input, shape index: {}]
  %s2 = inlined_call_operand.vmem [shape: f32[3,64,64], index: 2, kind: input, shape index: {}]
  %s3 = inlined_call_operand.vmem [shape: f32[64,1], index: 3, kind: input, shape index: {}]
  %s4 = inlined_call_operand.vmem [shape: f32[3,64,1], index: 4, kind: input, shape index: {}]
  %s5 = inlined_call_operand.vmem [shape: f32[8,128], index: 5, kind: output, shape index: {}]
  %s6 = sld [smem:[#allocation0]]
  $region30: #{critic_forward.1} parent=0
    _
  %s8 = ssub.s32 1, %s6
  %s9 = scalar_select 0, %s8, %s6
  // Predicated region
  $region2: #{critic_forward.1} parent=0 // pred_check
    _
  $region3: #{critic_forward.1} parent=0 // pred_check_branch
    %11 = sbr.rel (0) target = $region5
  $region4: #{critic_forward.1} parent=0 // pred_region
    _
  $region5: #{critic_forward.1} parent=0 // pred_fallthru
    _
  // Predicated region
  $region6: #{critic_forward.1} parent=0 // pred_check
    _
  $region7: #{critic_forward.1} parent=0 // pred_check_branch
    %13 = sbr.rel (0) target = $region9
  $region8: #{critic_forward.1} parent=0 // pred_region
    _
  $region9: #{critic_forward.1} parent=0 // pred_fallthru
    _
  // Predicated region
  $region10: #{critic_forward.1} parent=0 // pred_check
    _
  $region11: #{critic_forward.1} parent=0 // pred_check_branch
    %15 = sbr.rel (0) target = $region13
  $region12: #{critic_forward.1} parent=0 // pred_region
    _
  $region13: #{critic_forward.1} parent=0 // pred_fallthru
    _
  // Predicated region
  $region14: #{critic_forward.1} parent=0 // pred_check
    _
  $region15: #{critic_forward.1} parent=0 // pred_check_branch
    %17 = sbr.rel (0) target = $region17
  $region16: #{critic_forward.1} parent=0 // pred_region
    _
  $region17: #{critic_forward.1} parent=0 // pred_fallthru
    _
  // Predicated region
  $region18: #{critic_forward.1} parent=0 // pred_check
    _
  $region19: #{critic_forward.1} parent=0 // pred_check_branch
    %19 = sbr.rel (0) target = $region21
  $region20: #{critic_forward.1} parent=0 // pred_region
    _
  $region21: #{critic_forward.1} parent=0 // pred_fallthru
    _
  %v20 = vld [vmem:[%s1] sm:$0xff]
  %v21 = vld [vmem:[%s1 + $0x8] sm:$0xff]
  %v22 = vld [vmem:[%s1 + $0x10] sm:$0xff]
  %v23 = vld [vmem:[%s1 + $0x18] sm:$0xff]
  %v24 = vld [vmem:[%s1 + $0x20] sm:$0xff]
  %v25 = vld [vmem:[%s1 + $0x28] sm:$0xff]
  %v26 = vld [vmem:[%s1 + $0x30] sm:$0xff]
  %v27 = vld [vmem:[%s1 + $0x38] sm:$0xff]
  %v28 = vld [vmem:[%s0] sm:$0xff]
  %v29 = vld [vmem:[%s3] sm:$0xff]
  %v30 = vld [vmem:[%s3 + $0x8] sm:$0xff]
  %v31 = vld [vmem:[%s3 + $0x10] sm:$0xff]
  %v32 = vld [vmem:[%s3 + $0x18] sm:$0xff]
  %v33 = vld [vmem:[%s3 + $0x20] sm:$0xff]
  %v34 = vld [vmem:[%s3 + $0x28] sm:$0xff]
  %v35 = vld [vmem:[%s3 + $0x30] sm:$0xff]
  %v36 = vld [vmem:[%s3 + $0x38] sm:$0xff]
  %38 = vset.pattern.permute.xlu0 0
  %39 = vperm.xlu0 %38, %v29
  %v40 = vpop.permute.xlu0 %39
  %43 = vset.pattern.permute.xlu0 0
  %44 = vperm.xlu0 %43, %v30
  %v45 = vpop.permute.xlu0 %44
  %48 = vset.pattern.permute.xlu0 0
  %49 = vperm.xlu0 %48, %v31
  %v50 = vpop.permute.xlu0 %49
  %53 = vset.pattern.permute.xlu0 0
  %54 = vperm.xlu0 %53, %v32
  %v55 = vpop.permute.xlu0 %54
  %58 = vset.pattern.permute.xlu0 0
  %59 = vperm.xlu0 %58, %v33
  %v60 = vpop.permute.xlu0 %59
  %63 = vset.pattern.permute.xlu0 0
  %64 = vperm.xlu0 %63, %v34
  %v65 = vpop.permute.xlu0 %64
  %68 = vset.pattern.permute.xlu0 0
  %69 = vperm.xlu0 %68, %v35
  %v70 = vpop.permute.xlu0 %69
  %73 = vset.pattern.permute.xlu0 0
  %74 = vperm.xlu0 %73, %v36
  %v75 = vpop.permute.xlu0 %74
  %vm77 = vcmask 64512
  %v79 = vsel %vm77, %v20, 0
  %v82 = vsel %vm77, %v21, 0
  %v85 = vsel %vm77, %v22, 0
  %v88 = vsel %vm77, %v23, 0
  %v91 = vsel %vm77, %v24, 0
  %v94 = vsel %vm77, %v25, 0
  %v97 = vsel %vm77, %v26, 0
  %v100 = vsel %vm77, %v27, 0
  %102 = vmatprep.subr.mxu0 0.0
  %103 = vmatpush1.msra.mxu0 %v28
  %104 = vmatprep.subr.mxu0 0.0
  %105 = vmatpush1.msra.mxu0 0.0
  %106 = vmatprep.subr.mxu0 0.0
  %107 = vmatpush1.msra.mxu0 0.0
  %108 = vmatprep.subr.mxu0 0.0
  %109 = vmatpush1.msra.mxu0 0.0
  %110 = vmatprep.subr.mxu0 0.0
  %111 = vmatpush1.msra.mxu0 0.0
  %112 = vmatprep.subr.mxu0 0.0
  %113 = vmatpush1.msra.mxu0 0.0
  %114 = vmatprep.subr.mxu0 0.0
  %115 = vmatpush1.msra.mxu0 0.0
  %116 = vmatprep.subr.mxu0 0.0
  %117 = vmatpush1.msra.mxu0 0.0
  %118 = vmatprep.subr.mxu0 0.0
  %119 = vmatpush1.msra.mxu0 0.0
  %120 = vmatprep.subr.mxu0 0.0
  %121 = vmatpush1.msra.mxu0 0.0
  %122 = vmatprep.subr.mxu0 0.0
  %123 = vmatpush1.msra.mxu0 0.0
  %124 = vmatprep.subr.mxu0 0.0
  %125 = vmatpush1.msra.mxu0 0.0
  %126 = vmatprep.subr.mxu0 0.0
  %127 = vmatpush1.msra.mxu0 0.0
  %128 = vmatprep.subr.mxu0 0.0
  %129 = vmatpush1.msra.mxu0 0.0
  %130 = vmatprep.subr.mxu0 0.0
  %131 = vmatpush1.msra.mxu0 0.0
  %132 = vmatprep.subr.mxu0 0.0
  %133 = vmatpush1.msra.mxu0 0.0
  %134 = vmatprep.subr.mxu0 0.0
  %135 = vmatpush1.msra.mxu0 0.0
  %136 = vmatprep.subr.mxu0 0.0
  %137 = vmatpush1.msra.mxu0 0.0
  %138 = vmatprep.subr.mxu0 0.0
  %139 = vmatpush1.msra.mxu0 0.0
  %140 = vmatprep.subr.mxu0 0.0
  %141 = vmatpush1.msra.mxu0 0.0
  %142 = vmatprep.subr.mxu0 0.0
  %143 = vmatpush1.msra.mxu0 0.0
  %144 = vmatprep.subr.mxu0 0.0
  %145 = vmatpush1.msra.mxu0 0.0
  %146 = vmatprep.subr.mxu0 0.0
  %147 = vmatpush1.msra.mxu0 0.0
  %148 = vmatprep.subr.mxu0 0.0
  %149 = vmatpush1.msra.mxu0 0.0
  %150 = vmatprep.subr.mxu0 0.0
  %151 = vmatpush1.msra.mxu0 0.0
  %152 = vmatprep.subr.mxu0 0.0
  %153 = vmatpush1.msra.mxu0 0.0
  %154 = vmatprep.subr.mxu0 0.0
  %155 = vmatpush1.msra.mxu0 0.0
  %156 = vmatprep.subr.mxu0 0.0
  %157 = vmatpush1.msra.mxu0 0.0
  %158 = vmatprep.subr.mxu0 0.0
  %159 = vmatpush1.msra.mxu0 0.0
  %160 = vmatprep.subr.mxu0 0.0
  %161 = vmatpush1.msra.mxu0 0.0
  %162 = vmatprep.subr.mxu0 0.0
  %163 = vmatpush1.msra.mxu0 0.0
  %164 = vmatprep.subr.mxu0 0.0
  %165 = vmatpush1.msra.mxu0 0.0
  %166 = vmatprep.mubr.f32.mxu0 0.0
  %167 = vmatmul.mubr.f32.gmra.mrb[0].mxu0 %v79
  %v168 = vpop.f32.mrb[0].mxu0
  %v169 = vadd.f32 %v40, %v168
  %v170 = vpop.f32.mrb[0].mxu0
  %171 = vmatprep.mubr.f32.mxu0 0.0
  %172 = vmatmul.mubr.f32.gmra.mrb[0].mxu0 %v82
  %v173 = vpop.f32.mrb[0].mxu0
  %v174 = vadd.f32 %v45, %v173
  %v175 = vpop.f32.mrb[0].mxu0
  %176 = vmatprep.mubr.f32.mxu0 0.0
  %177 = vmatmul.mubr.f32.gmra.mrb[0].mxu0 %v85
  %v178 = vpop.f32.mrb[0].mxu0
  %v179 = vadd.f32 %v50, %v178
  %v180 = vpop.f32.mrb[0].mxu0
  %181 = vmatprep.mubr.f32.mxu0 0.0
  %182 = vmatmul.mubr.f32.gmra.mrb[0].mxu0 %v88
  %v183 = vpop.f32.mrb[0].mxu0
  %v184 = vadd.f32 %v55, %v183
  %v185 = vpop.f32.mrb[0].mxu0
  %186 = vmatprep.mubr.f32.mxu0 0.0
  %187 = vmatmul.mubr.f32.gmra.mrb[0].mxu0 %v91
  %v188 = vpop.f32.mrb[0].mxu0
  %v189 = vadd.f32 %v60, %v188
  %v190 = vpop.f32.mrb[0].mxu0
  %191 = vmatprep.mubr.f32.mxu0 0.0
  %192 = vmatmul.mubr.f32.gmra.mrb[0].mxu0 %v94
  %v193 = vpop.f32.mrb[0].mxu0
  %v194 = vadd.f32 %v65, %v193
  %v195 = vpop.f32.mrb[0].mxu0
  %196 = vmatprep.mubr.f32.mxu0 0.0
  %197 = vmatmul.mubr.f32.gmra.mrb[0].mxu0 %v97
  %v198 = vpop.f32.mrb[0].mxu0
  %v199 = vadd.f32 %v70, %v198
  %v200 = vpop.f32.mrb[0].mxu0
  %201 = vmatprep.mubr.f32.mxu0 0.0
  %202 = vmatmul.mubr.f32.gmra.mrb[0].mxu0 %v100
  %v203 = vpop.f32.mrb[0].mxu0
  %v204 = vadd.f32 %v75, %v203
  %v205 = vpop.f32.mrb[0].mxu0
  %206 = vdwg.mxu0
  %v207 = vmax.f32 %v169, 0.0
  %v208 = vmax.f32 %v174, 0.0
  %v209 = vmax.f32 %v179, 0.0
  %v210 = vmax.f32 %v184, 0.0
  %v211 = vmax.f32 %v189, 0.0
  %v212 = vmax.f32 %v194, 0.0
  %v213 = vmax.f32 %v199, 0.0
  %v214 = vmax.f32 %v204, 0.0
  %v215 = vld [vmem:[%s2] sm:$0xff]
  %v216 = vld [vmem:[%s2 + $0x8] sm:$0xff]
  %v217 = vld [vmem:[%s2 + $0x10] sm:$0xff]
  %v218 = vld [vmem:[%s2 + $0x18] sm:$0xff]
  %v219 = vld [vmem:[%s2 + $0x20] sm:$0xff]
  %v220 = vld [vmem:[%s2 + $0x28] sm:$0xff]
  %v221 = vld [vmem:[%s2 + $0x30] sm:$0xff]
  %v222 = vld [vmem:[%s2 + $0x38] sm:$0xff]
  %v223 = vld [vmem:[%s4] sm:$0xff]
  %v224 = vld [vmem:[%s4 + $0x8] sm:$0xff]
  %v225 = vld [vmem:[%s4 + $0x10] sm:$0xff]
  %v226 = vld [vmem:[%s4 + $0x18] sm:$0xff]
  %v227 = vld [vmem:[%s4 + $0x20] sm:$0xff]
  %v228 = vld [vmem:[%s4 + $0x28] sm:$0xff]
  %v229 = vld [vmem:[%s4 + $0x30] sm:$0xff]
  %v230 = vld [vmem:[%s4 + $0x38] sm:$0xff]
  %232 = vset.pattern.permute.xlu0 0
  %233 = vperm.xlu0 %232, %v223
  %v234 = vpop.permute.xlu0 %233
  %237 = vset.pattern.permute.xlu0 0
  %238 = vperm.xlu0 %237, %v224
  %v239 = vpop.permute.xlu0 %238
  %242 = vset.pattern.permute.xlu0 0
  %243 = vperm.xlu0 %242, %v225
  %v244 = vpop.permute.xlu0 %243
  %247 = vset.pattern.permute.xlu0 0
  %248 = vperm.xlu0 %247, %v226
  %v249 = vpop.permute.xlu0 %248
  %252 = vset.pattern.permute.xlu0 0
  %253 = vperm.xlu0 %252, %v227
  %v254 = vpop.permute.xlu0 %253
  %257 = vset.pattern.permute.xlu0 0
  %258 = vperm.xlu0 %257, %v228
  %v259 = vpop.permute.xlu0 %258
  %262 = vset.pattern.permute.xlu0 0
  %263 = vperm.xlu0 %262, %v229
  %v264 = vpop.permute.xlu0 %263
  %267 = vset.pattern.permute.xlu0 0
  %268 = vperm.xlu0 %267, %v230
  %v269 = vpop.permute.xlu0 %268
  %vm271 = vcmask 523264
  %v273 = vsel %vm271, %v215, 0
  %v276 = vsel %vm271, %v216, 0
  %v279 = vsel %vm271, %v217, 0
  %v282 = vsel %vm271, %v218, 0
  %v285 = vsel %vm271, %v219, 0
  %v288 = vsel %vm271, %v220, 0
  %v291 = vsel %vm271, %v221, 0
  %v294 = vsel %vm271, %v222, 0
  %296 = vmatprep.subr.mxu0 0.0
  %297 = vmatpush1.msra.mxu0 %v207
  %298 = vmatprep.subr.mxu0 0.0
  %299 = vmatpush1.msra.mxu0 %v208
  %300 = vmatprep.subr.mxu0 0.0
  %301 = vmatpush1.msra.mxu0 %v209
  %302 = vmatprep.subr.mxu0 0.0
  %303 = vmatpush1.msra.mxu0 %v210
  %304 = vmatprep.subr.mxu0 0.0
  %305 = vmatpush1.msra.mxu0 %v211
  %306 = vmatprep.subr.mxu0 0.0
  %307 = vmatpush1.msra.mxu0 %v212
  %308 = vmatprep.subr.mxu0 0.0
  %309 = vmatpush1.msra.mxu0 %v213
  %310 = vmatprep.subr.mxu0 0.0
  %311 = vmatpush1.msra.mxu0 %v214
  %312 = vmatprep.subr.mxu0 0.0
  %313 = vmatpush1.msra.mxu0 0.0
  %314 = vmatprep.subr.mxu0 0.0
  %315 = vmatpush1.msra.mxu0 0.0
  %316 = vmatprep.subr.mxu0 0.0
  %317 = vmatpush1.msra.mxu0 0.0
  %318 = vmatprep.subr.mxu0 0.0
  %319 = vmatpush1.msra.mxu0 0.0
  %320 = vmatprep.subr.mxu0 0.0
  %321 = vmatpush1.msra.mxu0 0.0
  %322 = vmatprep.subr.mxu0 0.0
  %323 = vmatpush1.msra.mxu0 0.0
  %324 = vmatprep.subr.mxu0 0.0
  %325 = vmatpush1.msra.mxu0 0.0
  %326 = vmatprep.subr.mxu0 0.0
  %327 = vmatpush1.msra.mxu0 0.0
  %328 = vmatprep.subr.mxu0 0.0
  %329 = vmatpush1.msra.mxu0 0.0
  %330 = vmatprep.subr.mxu0 0.0
  %331 = vmatpush1.msra.mxu0 0.0
  %332 = vmatprep.subr.mxu0 0.0
  %333 = vmatpush1.msra.mxu0 0.0
  %334 = vmatprep.subr.mxu0 0.0
  %335 = vmatpush1.msra.mxu0 0.0
  %336 = vmatprep.subr.mxu0 0.0
  %337 = vmatpush1.msra.mxu0 0.0
  %338 = vmatprep.subr.mxu0 0.0
  %339 = vmatpush1.msra.mxu0 0.0
  %340 = vmatprep.subr.mxu0 0.0
  %341 = vmatpush1.msra.mxu0 0.0
  %342 = vmatprep.subr.mxu0 0.0
  %343 = vmatpush1.msra.mxu0 0.0
  %344 = vmatprep.subr.mxu0 0.0
  %345 = vmatpush1.msra.mxu0 0.0
  %346 = vmatprep.subr.mxu0 0.0
  %347 = vmatpush1.msra.mxu0 0.0
  %348 = vmatprep.subr.mxu0 0.0
  %349 = vmatpush1.msra.mxu0 0.0
  %350 = vmatprep.subr.mxu0 0.0
  %351 = vmatpush1.msra.mxu0 0.0
  %352 = vmatprep.subr.mxu0 0.0
  %353 = vmatpush1.msra.mxu0 0.0
  %354 = vmatprep.subr.mxu0 0.0
  %355 = vmatpush1.msra.mxu0 0.0
  %356 = vmatprep.subr.mxu0 0.0
  %357 = vmatpush1.msra.mxu0 0.0
  %358 = vmatprep.subr.mxu0 0.0
  %359 = vmatpush1.msra.mxu0 0.0
  %360 = vmatprep.mubr.f32.mxu0 0.0
  %361 = vmatmul.mubr.f32.gmra.mrb[0].mxu0 %v273
  %v362 = vpop.f32.mrb[0].mxu0
  %v363 = vadd.f32 %v234, %v362
  %v364 = vpop.f32.mrb[0].mxu0
  %365 = vmatprep.mubr.f32.mxu0 0.0
  %366 = vmatmul.mubr.f32.gmra.mrb[0].mxu0 %v276
  %v367 = vpop.f32.mrb[0].mxu0
  %v368 = vadd.f32 %v239, %v367
  %v369 = vpop.f32.mrb[0].mxu0
  %370 = vmatprep.mubr.f32.mxu0 0.0
  %371 = vmatmul.mubr.f32.gmra.mrb[0].mxu0 %v279
  %v372 = vpop.f32.mrb[0].mxu0
  %v373 = vadd.f32 %v244, %v372
  %v374 = vpop.f32.mrb[0].mxu0
  %375 = vmatprep.mubr.f32.mxu0 0.0
  %376 = vmatmul.mubr.f32.gmra.mrb[0].mxu0 %v282
  %v377 = vpop.f32.mrb[0].mxu0
  %v378 = vadd.f32 %v249, %v377
  %v379 = vpop.f32.mrb[0].mxu0
  %380 = vmatprep.mubr.f32.mxu0 0.0
  %381 = vmatmul.mubr.f32.gmra.mrb[0].mxu0 %v285
  %v382 = vpop.f32.mrb[0].mxu0
  %v383 = vadd.f32 %v254, %v382
  %v384 = vpop.f32.mrb[0].mxu0
  %385 = vmatprep.mubr.f32.mxu0 0.0
  %386 = vmatmul.mubr.f32.gmra.mrb[0].mxu0 %v288
  %v387 = vpop.f32.mrb[0].mxu0
  %v388 = vadd.f32 %v259, %v387
  %v389 = vpop.f32.mrb[0].mxu0
  %390 = vmatprep.mubr.f32.mxu0 0.0
  %391 = vmatmul.mubr.f32.gmra.mrb[0].mxu0 %v291
  %v392 = vpop.f32.mrb[0].mxu0
  %v393 = vadd.f32 %v264, %v392
  %v394 = vpop.f32.mrb[0].mxu0
  %395 = vmatprep.mubr.f32.mxu0 0.0
  %396 = vmatmul.mubr.f32.gmra.mrb[0].mxu0 %v294
  %v397 = vpop.f32.mrb[0].mxu0
  %v398 = vadd.f32 %v269, %v397
  %v399 = vpop.f32.mrb[0].mxu0
  %400 = vdwg.mxu0
  %v401 = vmax.f32 %v363, 0.0
  %v402 = vmax.f32 %v368, 0.0
  %v403 = vmax.f32 %v373, 0.0
  %v404 = vmax.f32 %v378, 0.0
  %v405 = vmax.f32 %v383, 0.0
  %v406 = vmax.f32 %v388, 0.0
  %v407 = vmax.f32 %v393, 0.0
  %v408 = vmax.f32 %v398, 0.0
  %s409 = scalar_lea.vmem %s2, 64
  %v410 = vld [vmem:[%s409] sm:$0xff]
  %v411 = vld [vmem:[%s409 + $0x8] sm:$0xff]
  %v412 = vld [vmem:[%s409 + $0x10] sm:$0xff]
  %v413 = vld [vmem:[%s409 + $0x18] sm:$0xff]
  %v414 = vld [vmem:[%s409 + $0x20] sm:$0xff]
  %v415 = vld [vmem:[%s409 + $0x28] sm:$0xff]
  %v416 = vld [vmem:[%s409 + $0x30] sm:$0xff]
  %v417 = vld [vmem:[%s409 + $0x38] sm:$0xff]
  %s418 = scalar_lea.vmem %s4, 64
  %v419 = vld [vmem:[%s418] sm:$0xff]
  %v420 = vld [vmem:[%s418 + $0x8] sm:$0xff]
  %v421 = vld [vmem:[%s418 + $0x10] sm:$0xff]
  %v422 = vld [vmem:[%s418 + $0x18] sm:$0xff]
  %v423 = vld [vmem:[%s418 + $0x20] sm:$0xff]
  %v424 = vld [vmem:[%s418 + $0x28] sm:$0xff]
  %v425 = vld [vmem:[%s418 + $0x30] sm:$0xff]
  %v426 = vld [vmem:[%s418 + $0x38] sm:$0xff]
  %428 = vset.pattern.permute.xlu0 0
  %429 = vperm.xlu0 %428, %v419
  %v430 = vpop.permute.xlu0 %429
  %433 = vset.pattern.permute.xlu0 0
  %434 = vperm.xlu0 %433, %v420
  %v435 = vpop.permute.xlu0 %434
  %438 = vset.pattern.permute.xlu0 0
  %439 = vperm.xlu0 %438, %v421
  %v440 = vpop.permute.xlu0 %439
  %443 = vset.pattern.permute.xlu0 0
  %444 = vperm.xlu0 %443, %v422
  %v445 = vpop.permute.xlu0 %444
  %448 = vset.pattern.permute.xlu0 0
  %449 = vperm.xlu0 %448, %v423
  %v450 = vpop.permute.xlu0 %449
  %453 = vset.pattern.permute.xlu0 0
  %454 = vperm.xlu0 %453, %v424
  %v455 = vpop.permute.xlu0 %454
  %458 = vset.pattern.permute.xlu0 0
  %459 = vperm.xlu0 %458, %v425
  %v460 = vpop.permute.xlu0 %459
  %463 = vset.pattern.permute.xlu0 0
  %464 = vperm.xlu0 %463, %v426
  %v465 = vpop.permute.xlu0 %464
  %v468 = vsel %vm271, %v410, 0
  %v471 = vsel %vm271, %v411, 0
  %v474 = vsel %vm271, %v412, 0
  %v477 = vsel %vm271, %v413, 0
  %v480 = vsel %vm271, %v414, 0
  %v483 = vsel %vm271, %v415, 0
  %v486 = vsel %vm271, %v416, 0
  %v489 = vsel %vm271, %v417, 0
  %491 = vmatprep.subr.mxu0 0.0
  %492 = vmatpush1.msra.mxu0 %v401
  %493 = vmatprep.subr.mxu0 0.0
  %494 = vmatpush1.msra.mxu0 %v402
  %495 = vmatprep.subr.mxu0 0.0
  %496 = vmatpush1.msra.mxu0 %v403
  %497 = vmatprep.subr.mxu0 0.0
  %498 = vmatpush1.msra.mxu0 %v404
  %499 = vmatprep.subr.mxu0 0.0
  %500 = vmatpush1.msra.mxu0 %v405
  %501 = vmatprep.subr.mxu0 0.0
  %502 = vmatpush1.msra.mxu0 %v406
  %503 = vmatprep.subr.mxu0 0.0
  %504 = vmatpush1.msra.mxu0 %v407
  %505 = vmatprep.subr.mxu0 0.0
  %506 = vmatpush1.msra.mxu0 %v408
  %507 = vmatprep.subr.mxu0 0.0
  %508 = vmatpush1.msra.mxu0 0.0
  %509 = vmatprep.subr.mxu0 0.0
  %510 = vmatpush1.msra.mxu0 0.0
  %511 = vmatprep.subr.mxu0 0.0
  %512 = vmatpush1.msra.mxu0 0.0
  %513 = vmatprep.subr.mxu0 0.0
  %514 = vmatpush1.msra.mxu0 0.0
  %515 = vmatprep.subr.mxu0 0.0
  %516 = vmatpush1.msra.mxu0 0.0
  %517 = vmatprep.subr.mxu0 0.0
  %518 = vmatpush1.msra.mxu0 0.0
  %519 = vmatprep.subr.mxu0 0.0
  %520 = vmatpush1.msra.mxu0 0.0
  %521 = vmatprep.subr.mxu0 0.0
  %522 = vmatpush1.msra.mxu0 0.0
  %523 = vmatprep.subr.mxu0 0.0
  %524 = vmatpush1.msra.mxu0 0.0
  %525 = vmatprep.subr.mxu0 0.0
  %526 = vmatpush1.msra.mxu0 0.0
  %527 = vmatprep.subr.mxu0 0.0
  %528 = vmatpush1.msra.mxu0 0.0
  %529 = vmatprep.subr.mxu0 0.0
  %530 = vmatpush1.msra.mxu0 0.0
  %531 = vmatprep.subr.mxu0 0.0
  %532 = vmatpush1.msra.mxu0 0.0
  %533 = vmatprep.subr.mxu0 0.0
  %534 = vmatpush1.msra.mxu0 0.0
  %535 = vmatprep.subr.mxu0 0.0
  %536 = vmatpush1.msra.mxu0 0.0
  %537 = vmatprep.subr.mxu0 0.0
  %538 = vmatpush1.msra.mxu0 0.0
  %539 = vmatprep.subr.mxu0 0.0
  %540 = vmatpush1.msra.mxu0 0.0
  %541 = vmatprep.subr.mxu0 0.0
  %542 = vmatpush1.msra.mxu0 0.0
  %543 = vmatprep.subr.mxu0 0.0
  %544 = vmatpush1.msra.mxu0 0.0
  %545 = vmatprep.subr.mxu0 0.0
  %546 = vmatpush1.msra.mxu0 0.0
  %547 = vmatprep.subr.mxu0 0.0
  %548 = vmatpush1.msra.mxu0 0.0
  %549 = vmatprep.subr.mxu0 0.0
  %550 = vmatpush1.msra.mxu0 0.0
  %551 = vmatprep.subr.mxu0 0.0
  %552 = vmatpush1.msra.mxu0 0.0
  %553 = vmatprep.subr.mxu0 0.0
  %554 = vmatpush1.msra.mxu0 0.0
  %555 = vmatprep.mubr.f32.mxu0 0.0
  %556 = vmatmul.mubr.f32.gmra.mrb[0].mxu0 %v468
  %v557 = vpop.f32.mrb[0].mxu0
  %v558 = vadd.f32 %v430, %v557
  %v559 = vpop.f32.mrb[0].mxu0
  %560 = vmatprep.mubr.f32.mxu0 0.0
  %561 = vmatmul.mubr.f32.gmra.mrb[0].mxu0 %v471
  %v562 = vpop.f32.mrb[0].mxu0
  %v563 = vadd.f32 %v435, %v562
  %v564 = vpop.f32.mrb[0].mxu0
  %565 = vmatprep.mubr.f32.mxu0 0.0
  %566 = vmatmul.mubr.f32.gmra.mrb[0].mxu0 %v474
  %v567 = vpop.f32.mrb[0].mxu0
  %v568 = vadd.f32 %v440, %v567
  %v569 = vpop.f32.mrb[0].mxu0
  %570 = vmatprep.mubr.f32.mxu0 0.0
  %571 = vmatmul.mubr.f32.gmra.mrb[0].mxu0 %v477
  %v572 = vpop.f32.mrb[0].mxu0
  %v573 = vadd.f32 %v445, %v572
  %v574 = vpop.f32.mrb[0].mxu0
  %575 = vmatprep.mubr.f32.mxu0 0.0
  %576 = vmatmul.mubr.f32.gmra.mrb[0].mxu0 %v480
  %v577 = vpop.f32.mrb[0].mxu0
  %v578 = vadd.f32 %v450, %v577
  %v579 = vpop.f32.mrb[0].mxu0
  %580 = vmatprep.mubr.f32.mxu0 0.0
  %581 = vmatmul.mubr.f32.gmra.mrb[0].mxu0 %v483
  %v582 = vpop.f32.mrb[0].mxu0
  %v583 = vadd.f32 %v455, %v582
  %v584 = vpop.f32.mrb[0].mxu0
  %585 = vmatprep.mubr.f32.mxu0 0.0
  %586 = vmatmul.mubr.f32.gmra.mrb[0].mxu0 %v486
  %v587 = vpop.f32.mrb[0].mxu0
  %v588 = vadd.f32 %v460, %v587
  %v589 = vpop.f32.mrb[0].mxu0
  %590 = vmatprep.mubr.f32.mxu0 0.0
  %591 = vmatmul.mubr.f32.gmra.mrb[0].mxu0 %v489
  %v592 = vpop.f32.mrb[0].mxu0
  %v593 = vadd.f32 %v465, %v592
  %v594 = vpop.f32.mrb[0].mxu0
  %595 = vdwg.mxu0
  %v596 = vmax.f32 %v558, 0.0
  %v597 = vmax.f32 %v563, 0.0
  %v598 = vmax.f32 %v568, 0.0
  %v599 = vmax.f32 %v573, 0.0
  %v600 = vmax.f32 %v578, 0.0
  %v601 = vmax.f32 %v583, 0.0
  %v602 = vmax.f32 %v588, 0.0
  %v603 = vmax.f32 %v593, 0.0
  %s604 = scalar_lea.vmem %s2, 128
  %v605 = vld [vmem:[%s604] sm:$0xff]
  %v606 = vld [vmem:[%s604 + $0x8] sm:$0xff]
  %v607 = vld [vmem:[%s604 + $0x10] sm:$0xff]
  %v608 = vld [vmem:[%s604 + $0x18] sm:$0xff]
  %v609 = vld [vmem:[%s604 + $0x20] sm:$0xff]
  %v610 = vld [vmem:[%s604 + $0x28] sm:$0xff]
  %v611 = vld [vmem:[%s604 + $0x30] sm:$0xff]
  %v612 = vld [vmem:[%s604 + $0x38] sm:$0xff]
  %s613 = scalar_lea.vmem %s4, 128
  %v614 = vld [vmem:[%s613] sm:$0xff]
  %v615 = vld [vmem:[%s613 + $0x8] sm:$0xff]
  %v616 = vld [vmem:[%s613 + $0x10] sm:$0xff]
  %v617 = vld [vmem:[%s613 + $0x18] sm:$0xff]
  %v618 = vld [vmem:[%s613 + $0x20] sm:$0xff]
  %v619 = vld [vmem:[%s613 + $0x28] sm:$0xff]
  %v620 = vld [vmem:[%s613 + $0x30] sm:$0xff]
  %v621 = vld [vmem:[%s613 + $0x38] sm:$0xff]
  %623 = vset.pattern.permute.xlu0 0
  %624 = vperm.xlu0 %623, %v614
  %v625 = vpop.permute.xlu0 %624
  %628 = vset.pattern.permute.xlu0 0
  %629 = vperm.xlu0 %628, %v615
  %v630 = vpop.permute.xlu0 %629
  %632 = vset.pattern.permute.xlu0 0
  %633 = vperm.xlu0 %632, %v616
  %v634 = vpop.permute.xlu0 %633
  %636 = vset.pattern.permute.xlu0 0
  %637 = vperm.xlu0 %636, %v617
  %v638 = vpop.permute.xlu0 %637
  %640 = vset.pattern.permute.xlu0 0
  %641 = vperm.xlu0 %640, %v618
  %v642 = vpop.permute.xlu0 %641
  %644 = vset.pattern.permute.xlu0 0
  %645 = vperm.xlu0 %644, %v619
  %v646 = vpop.permute.xlu0 %645
  %648 = vset.pattern.permute.xlu0 0
  %649 = vperm.xlu0 %648, %v620
  %v650 = vpop.permute.xlu0 %649
  %652 = vset.pattern.permute.xlu0 0
  %653 = vperm.xlu0 %652, %v621
  %v654 = vpop.permute.xlu0 %653
  %v656 = vsel %vm271, %v605, 0
  %v659 = vsel %vm271, %v606, 0
  %v662 = vsel %vm271, %v607, 0
  %v665 = vsel %vm271, %v608, 0
  %v668 = vsel %vm271, %v609, 0
  %v671 = vsel %vm271, %v610, 0
  %v674 = vsel %vm271, %v611, 0
  %v677 = vsel %vm271, %v612, 0
  %679 = vmatprep.subr.mxu0 0.0
  %680 = vmatpush1.msra.mxu0 %v596
  %681 = vmatprep.subr.mxu0 0.0
  %682 = vmatpush1.msra.mxu0 %v597
  %683 = vmatprep.subr.mxu0 0.0
  %684 = vmatpush1.msra.mxu0 %v598
  %685 = vmatprep.subr.mxu0 0.0
  %686 = vmatpush1.msra.mxu0 %v599
  %687 = vmatprep.subr.mxu0 0.0
  %688 = vmatpush1.msra.mxu0 %v600
  %689 = vmatprep.subr.mxu0 0.0
  %690 = vmatpush1.msra.mxu0 %v601
  %691 = vmatprep.subr.mxu0 0.0
  %692 = vmatpush1.msra.mxu0 %v602
  %693 = vmatprep.subr.mxu0 0.0
  %694 = vmatpush1.msra.mxu0 %v603
  %695 = vmatprep.subr.mxu0 0.0
  %696 = vmatpush1.msra.mxu0 0.0
  %697 = vmatprep.subr.mxu0 0.0
  %698 = vmatpush1.msra.mxu0 0.0
  %699 = vmatprep.subr.mxu0 0.0
  %700 = vmatpush1.msra.mxu0 0.0
  %701 = vmatprep.subr.mxu0 0.0
  %702 = vmatpush1.msra.mxu0 0.0
  %703 = vmatprep.subr.mxu0 0.0
  %704 = vmatpush1.msra.mxu0 0.0
  %705 = vmatprep.subr.mxu0 0.0
  %706 = vmatpush1.msra.mxu0 0.0
  %707 = vmatprep.subr.mxu0 0.0
  %708 = vmatpush1.msra.mxu0 0.0
  %709 = vmatprep.subr.mxu0 0.0
  %710 = vmatpush1.msra.mxu0 0.0
  %711 = vmatprep.subr.mxu0 0.0
  %712 = vmatpush1.msra.mxu0 0.0
  %713 = vmatprep.subr.mxu0 0.0
  %714 = vmatpush1.msra.mxu0 0.0
  %715 = vmatprep.subr.mxu0 0.0
  %716 = vmatpush1.msra.mxu0 0.0
  %717 = vmatprep.subr.mxu0 0.0
  %718 = vmatpush1.msra.mxu0 0.0
  %719 = vmatprep.subr.mxu0 0.0
  %720 = vmatpush1.msra.mxu0 0.0
  %721 = vmatprep.subr.mxu0 0.0
  %722 = vmatpush1.msra.mxu0 0.0
  %723 = vmatprep.subr.mxu0 0.0
  %724 = vmatpush1.msra.mxu0 0.0
  %725 = vmatprep.subr.mxu0 0.0
  %726 = vmatpush1.msra.mxu0 0.0
  %727 = vmatprep.subr.mxu0 0.0
  %728 = vmatpush1.msra.mxu0 0.0
  %729 = vmatprep.subr.mxu0 0.0
  %730 = vmatpush1.msra.mxu0 0.0
  %731 = vmatprep.subr.mxu0 0.0
  %732 = vmatpush1.msra.mxu0 0.0
  %733 = vmatprep.subr.mxu0 0.0
  %734 = vmatpush1.msra.mxu0 0.0
  %735 = vmatprep.subr.mxu0 0.0
  %736 = vmatpush1.msra.mxu0 0.0
  %737 = vmatprep.subr.mxu0 0.0
  %738 = vmatpush1.msra.mxu0 0.0
  %739 = vmatprep.subr.mxu0 0.0
  %740 = vmatpush1.msra.mxu0 0.0
  %741 = vmatprep.subr.mxu0 0.0
  %742 = vmatpush1.msra.mxu0 0.0
  %743 = vmatprep.mubr.f32.mxu0 0.0
  %744 = vmatmul.mubr.f32.gmra.mrb[0].mxu0 %v656
  %v745 = vpop.f32.mrb[0].mxu0
  %v746 = vadd.f32 %v625, %v745
  %v747 = vpop.f32.mrb[0].mxu0
  %748 = vmatprep.mubr.f32.mxu0 0.0
  %749 = vmatmul.mubr.f32.gmra.mrb[0].mxu0 %v659
  %v750 = vpop.f32.mrb[0].mxu0
  %v751 = vpop.f32.mrb[0].mxu0
  %752 = vmatprep.mubr.f32.mxu0 0.0
  %753 = vmatmul.mubr.f32.gmra.mrb[0].mxu0 %v662
  %v754 = vpop.f32.mrb[0].mxu0
  %v755 = vpop.f32.mrb[0].mxu0
  %756 = vmatprep.mubr.f32.mxu0 0.0
  %757 = vmatmul.mubr.f32.gmra.mrb[0].mxu0 %v665
  %v758 = vpop.f32.mrb[0].mxu0
  %v759 = vpop.f32.mrb[0].mxu0
  %760 = vmatprep.mubr.f32.mxu0 0.0
  %761 = vmatmul.mubr.f32.gmra.mrb[0].mxu0 %v668
  %v762 = vpop.f32.mrb[0].mxu0
  %v763 = vpop.f32.mrb[0].mxu0
  %764 = vmatprep.mubr.f32.mxu0 0.0
  %765 = vmatmul.mubr.f32.gmra.mrb[0].mxu0 %v671
  %v766 = vpop.f32.mrb[0].mxu0
  %v767 = vpop.f32.mrb[0].mxu0
  %768 = vmatprep.mubr.f32.mxu0 0.0
  %769 = vmatmul.mubr.f32.gmra.mrb[0].mxu0 %v674
  %v770 = vpop.f32.mrb[0].mxu0
  %v771 = vpop.f32.mrb[0].mxu0
  %772 = vmatprep.mubr.f32.mxu0 0.0
  %773 = vmatmul.mubr.f32.gmra.mrb[0].mxu0 %v677
  %v774 = vpop.f32.mrb[0].mxu0
  %v775 = vpop.f32.mrb[0].mxu0
  %776 = vdwg.mxu0
  %v777 = vmax.f32 %v746, 0.0
  %778 = vst [vmem:[%s5] sm:$0xff] %v777
  // Predicated region
  $region22: #{critic_forward.1} parent=0 // pred_check
    _
  $region23: #{critic_forward.1} parent=0 // pred_check_branch
    %780 = sbr.rel (0) target = $region25
  $region24: #{critic_forward.1} parent=0 // pred_region
    _
  $region25: #{critic_forward.1} parent=0 // pred_fallthru
    _
  // Predicated region
  $region26: #{critic_forward.1} parent=0 // pred_check
    _
  $region27: #{critic_forward.1} parent=0 // pred_check_branch
    %782 = sbr.rel (0) target = $region29
  $region28: #{critic_forward.1} parent=0 // pred_region
    _
  $region29: #{critic_forward.1} parent=0 // pred_fallthru
    _

</llo_original>
